<compile_context>
chip_gen: v5e
topology: v5e:2x2
jax: 0.10.0
libtpu: 0.0.40
codegen_flags: <defaults>
</compile_context>

<pallas_src>
import math
from functools import partial

import jax
import jax.numpy as jnp
from jax.experimental import pallas as pl
from jax.experimental.pallas import tpu as pltpu


def _round_up(x, m):
    return -(-x // m) * m


def _conv2d_kernel(w_ref, b_ref, x_ref, o_ref, xpad_ref, *,
                   C, K, dilation, stride, padding, N, D, n_out, w_out):
    """Direct shift-and-scale 2D conv (single input channel), batched tile.

    w_ref    : SMEM (C*K*K,) f32 conv weights (c-major, then kh, kw).
    b_ref    : SMEM (C,)     f32 bias.
    x_ref    : VMEM (TB, N, D) unpadded input tile (TB batch elements).
    o_ref    : VMEM (TB, n_out, C*w_out) output tile (channel-major last dim,
               matching PyTorch's transpose(1,2).view(b, n, w*c) layout).
    xpad_ref : VMEM (TB, Np, LP) zero-padded input scratch; lane dim LP is
               padded up to a multiple of 128 (min 128).
    """
    TB, Np, LP = xpad_ref.shape
    p = padding

    # Zero only the padding border; the interior is fully overwritten below.
    # (Border is re-zeroed every step rather than guarded on program_id==0 so
    # the kernel stays correct when the parallel axis is split across cores.)
    if p > 0:
        xpad_ref[:, pl.ds(0, p), :] = jnp.zeros((TB, p, LP), jnp.float32)
        xpad_ref[:, pl.ds(p + N, p), :] = jnp.zeros((TB, p, LP), jnp.float32)
        xpad_ref[:, pl.ds(p, N), pl.ds(0, p)] = jnp.zeros((TB, N, p), jnp.float32)
    # Right strip covers both the conv zero-padding and the lane padding.
    rw = LP - p - D
    if rw > 0:
        xpad_ref[:, pl.ds(p, N), pl.ds(p + D, rw)] = jnp.zeros(
            (TB, N, rw), jnp.float32)
    xpad_ref[:, pl.ds(p, N), pl.ds(p, D)] = x_ref[...]

    acc_w = LP if stride == 1 else w_out

    # Channel-outermost loop => exactly one accumulator live at any time.
    for c in range(C):
        # Bias folded into accumulator init (scalar broadcast from SMEM).
        acc = jnp.full((TB, n_out, acc_w), b_ref[c], jnp.float32)
        for kh in range(K):
            if stride == 1:
                # One full-width band load per (c, kh); kw shifts are lane
                # rotations (XLU) of the in-register band, not extra VMEM
                # loads.  Valid output columns (< w_out) never see the
                # circular wrap-around lanes.
                band = xpad_ref[:, pl.ds(kh * dilation, n_out), :]
                for kw in range(K):
                    shift = kw * dilation
                    win = band if shift == 0 else pltpu.roll(band, LP - shift, axis=2)
                    acc = acc + w_ref[c * K * K + kh * K + kw] * win
            else:
                # TODO(synk): stride > 1 relies on lane-strided pl.ds ref
                # loads; Mosaic lowering of this path is not exercised below.
                rows = pl.ds(kh * dilation, n_out, stride)
                for kw in range(K):
                    win = xpad_ref[:, rows, pl.ds(kw * dilation, w_out, stride)]
                    acc = acc + w_ref[c * K * K + kh * K + kw] * win
        # Store the finished channel straight into its slice of the
        # channel-concatenated output slab (no jnp.concatenate).
        o_ref[:, :, pl.ds(c * w_out, w_out)] = acc[:, :, :w_out]


class CNN2DLayerPallas:
    """JAX/Pallas re-implementation of the PyTorch CNN2DLayer forward pass."""

    def __init__(self, input_dim, output_dim, kernel_size=3, dilation=1,
                 stride=1, key=None):
        self.num_filters = int(output_dim * stride / input_dim)
        if self.num_filters < 1:
            raise ValueError(
                f"output_dim*stride/input_dim truncates to {self.num_filters}; "
                "pick dims so that at least one filter is produced.")
        self.output_dim = int(self.num_filters * input_dim / stride)
        self.input_dim = input_dim
        if not kernel_size % 2:
            kernel_size += 1
        self.kernel_size = kernel_size
        self.dilation = dilation
        self.stride = stride
        self.padding = int(dilation * (kernel_size - 1) / 2)

        # Deterministic init mirroring torch.nn.Conv2d defaults
        # (kaiming-uniform bound = 1/sqrt(fan_in), fan_in = 1 * K * K).
        fan_in = 1 * self.kernel_size * self.kernel_size
        bound = 1.0 / math.sqrt(fan_in)
        k_w, k_b = jax.random.split(key)
        self.weight = jax.random.uniform(
            k_w, (self.num_filters, 1, self.kernel_size, self.kernel_size),
            minval=-bound, maxval=bound, dtype=jnp.float32)
        self.bias = jax.random.uniform(
            k_b, (self.num_filters,), minval=-bound, maxval=bound,
            dtype=jnp.float32)

    def get_output_lengths(self, input_lengths):
        s = self.stride
        return [int((ln + s - 1) / s) for ln in input_lengths]

    def __call__(self, x, max_batch_tile=128):
        feats = x['features'].astype(jnp.float32)
        B, N, D = feats.shape
        assert D == self.input_dim

        p, K, dil, s, C = (self.padding, self.kernel_size, self.dilation,
                           self.stride, self.num_filters)
        n_out = (N + 2 * p - dil * (K - 1) - 1) // s + 1
        w_out = (D + 2 * p - dil * (K - 1) - 1) // s + 1
        Np = N + 2 * p
        LP = max(128, _round_up(D + 2 * p, 128))   # lane-padded scratch width
        Cw = C * w_out

        # Generation-aware VMEM budget (v5e/v6e: 128 MiB, v7x: 64 MiB/core).
        try:
            vmem_cap = int(pltpu.get_tpu_info().vmem_capacity_bytes)
        except Exception:
            vmem_cap = 64 * 1024 * 1024            # conservative (v7x)
        vmem_limit = vmem_cap // 2                 # 64 MiB / 32 MiB
        block_budget = (vmem_cap * 3) // 8         # 48 MiB / 24 MiB

        # Batch tile: bounded by VMEM (double-buffered in/out blocks + padded
        # scratch) and by vreg pressure (~3 live (TB, n_out, LP) f32 tiles
        # must stay under ~48 of the 64 vregs so the tap loop never spills).
        bytes_per_b = 4 * (2 * N * D + 2 * n_out * Cw + Np * LP)
        tb_vmem = max(1, block_budget // bytes_per_b)
        vregs_per_b = (-(-n_out // 8)) * (LP // 128)
        tb_vreg = max(1, 16 // vregs_per_b)
        TB = int(max(1, min(B, max_batch_tile, tb_vmem, tb_vreg)))
        # v7x has two TensorCores sharing the parallel grid axis: keep at
        # least two grid steps whenever the batch allows it.
        if B >= 2:
            TB = min(TB, -(-B // 2))
        grid = (pl.cdiv(B, TB),)

        kernel = partial(_conv2d_kernel, C=C, K=K, dilation=dil, stride=s,
                         padding=p, N=N, D=D, n_out=n_out, w_out=w_out)

        out = pl.pallas_call(
            kernel,
            out_shape=jax.ShapeDtypeStruct((B, n_out, Cw), jnp.float32),
            grid=grid,
            in_specs=[
                pl.BlockSpec(memory_space=pltpu.MemorySpace.SMEM),   # weights
                pl.BlockSpec(memory_space=pltpu.MemorySpace.SMEM),   # bias
                pl.BlockSpec((TB, N, D), lambda i: (i, 0, 0)),       # input
            ],
            out_specs=pl.BlockSpec((TB, n_out, Cw), lambda i: (i, 0, 0)),
            scratch_shapes=[pltpu.VMEM((TB, Np, LP), jnp.float32)],
            compiler_params=pltpu.CompilerParams(
                dimension_semantics=("parallel",),
                vmem_limit_bytes=vmem_limit),
        )(self.weight.reshape(-1), self.bias, feats)

        y = {k: v for k, v in x.items()}
        y['features'] = out
        y['lengths'] = self.get_output_lengths(x['lengths'])
        return y


def _reference(feats, layer):
    """Pure-JAX reference of the exact PyTorch forward (NCHW conv + reshape)."""
    p, K, dil, s, C = (layer.padding, layer.kernel_size, layer.dilation,
                       layer.stride, layer.num_filters)
    ref = jax.lax.conv_general_dilated(
        feats[:, None, :, :], layer.weight,
        window_strides=(s, s), padding=[(p, p), (p, p)],
        rhs_dilation=(dil, dil),
        dimension_numbers=('NCHW', 'OIHW', 'NCHW'))
    ref = ref + layer.bias[None, :, None, None]
    B, _, n_out, w_out = ref.shape
    return jnp.transpose(ref, (0, 2, 1, 3)).reshape(B, n_out, C * w_out)


if __name__ == "__main__":
    key = jax.random.PRNGKey(0)

    # --- Config 1: B=2, seq N=16, input_dim D=16, output_dim=32, stride=1
    #     -> num_filters=2, kernel=3, dilation=1, pad=1.  TB=1 -> 2 grid steps.
    k_data, k_layer, key = jax.random.split(key, 3)
    B, N, D, output_dim = 2, 16, 16, 32
    feats = jax.random.normal(k_data, (B, N, D), dtype=jnp.float32)
    x = {'features': feats, 'lengths': [N, N - 3]}
    layer = CNN2DLayerPallas(input_dim=D, output_dim=output_dim,
                             kernel_size=3, dilation=1, stride=1, key=k_layer)
    y = layer(x)
    out = jax.block_until_ready(y['features'])
    ref = _reference(feats, layer)
    assert out.shape == ref.shape == (B, N, output_dim)
    assert y['lengths'] == [N, N - 3]
    assert jnp.allclose(out, ref, atol=1e-4, rtol=1e-4)

    # --- Config 2: non-divisible batch tiling (B=5, TB=2 -> 3 grid steps,
    #     partial last block), kernel=5, dilation=2, num_filters=3.
    k_data2, k_layer2, key = jax.random.split(key, 3)
    B2, N2, D2, output_dim2 = 5, 24, 32, 96
    feats2 = jax.random.normal(k_data2, (B2, N2, D2), dtype=jnp.float32)
    x2 = {'features': feats2, 'lengths': [24, 20, 24, 10, 24]}
    layer2 = CNN2DLayerPallas(input_dim=D2, output_dim=output_dim2,
                              kernel_size=5, dilation=2, stride=1,
                              key=k_layer2)
    y2 = layer2(x2, max_batch_tile=2)
    out2 = jax.block_until_ready(y2['features'])
    ref2 = _reference(feats2, layer2)
    assert out2.shape == ref2.shape
    assert y2['lengths'] == [24, 20, 24, 10, 24]
    assert jnp.allclose(out2, ref2, atol=1e-4, rtol=1e-4)

    # --- Config 3: larger batch so TB > 1 (B=8 -> TB=4, 2 grid steps),
    #     exercising multi-element batch tiles on the band+roll path.
    k_data3, key = jax.random.split(key)
    B3 = 8
    feats3 = jax.random.normal(k_data3, (B3, N, D), dtype=jnp.float32)
    x3 = {'features': feats3, 'lengths': [N] * B3}
    y3 = layer(x3)
    out3 = jax.block_until_ready(y3['features'])
    ref3 = _reference(feats3, layer)
    assert out3.shape == ref3.shape
    assert jnp.allclose(out3, ref3, atol=1e-4, rtol=1e-4)

    # TODO(synk): stride > 1 path (lane-strided pl.ds loads) is not exercised.
    print("KERNEL_OK")
</pallas_src>

<mosaic_0001>
module attributes {stable_mosaic.version = 11 : i64} {
  func.func @_conv2d_kernel(%arg0: i32, %arg1: memref<18xf32, #tpu.memory_space<smem>>, %arg2: memref<2xf32, #tpu.memory_space<smem>>, %arg3: memref<1x16x16xf32, #tpu.memory_space<vmem>>, %arg4: memref<1x16x32xf32, #tpu.memory_space<vmem>>, %arg5: memref<1x18x128xf32, #tpu.memory_space<vmem>>) attributes {dimension_semantics = [#tpu.dimension_semantics<parallel>], iteration_bounds = array<i64: 2>, scalar_prefetch = 0 : i64, scratch_operands = 1 : i64, tpu.core_type = #tpu.core_type<tc>, window_params = [{transform_indices = @transform_0, window_bounds = array<i64: 18>}, {transform_indices = @transform_1, window_bounds = array<i64: 2>}, {transform_indices = @transform_2, window_bounds = array<i64: 1, 16, 16>}, {transform_indices = @transform_3, window_bounds = array<i64: 1, 16, 32>}]} {
    %cst = arith.constant 0.000000e+00 : f32
    %0 = vector.broadcast %cst : f32 to vector<1x1x128xf32>
    %c0 = arith.constant 0 : index
    %c0_0 = arith.constant 0 : index
    %c0_1 = arith.constant 0 : index
    %1 = vector.load %arg5[%c0, %c0_0, %c0_1] : memref<1x18x128xf32, #tpu.memory_space<vmem>>, vector<1x1x128xf32>
    tpu.vector_store %arg5[%c0, %c0_0, %c0_1], %0 {strides = array<i32>} : memref<1x18x128xf32, #tpu.memory_space<vmem>>, vector<1x1x128xf32>,
    %cst_2 = arith.constant 0.000000e+00 : f32
    %2 = vector.broadcast %cst_2 : f32 to vector<1x1x128xf32>
    %c0_3 = arith.constant 0 : index
    %c17 = arith.constant 17 : index
    %c0_4 = arith.constant 0 : index
    %3 = vector.load %arg5[%c0_3, %c17, %c0_4] : memref<1x18x128xf32, #tpu.memory_space<vmem>>, vector<1x1x128xf32>
    tpu.vector_store %arg5[%c0_3, %c17, %c0_4], %2 {strides = array<i32>} : memref<1x18x128xf32, #tpu.memory_space<vmem>>, vector<1x1x128xf32>,
    %cst_5 = arith.constant 0.000000e+00 : f32
    %4 = vector.broadcast %cst_5 : f32 to vector<1x16x1xf32>
    %c0_6 = arith.constant 0 : index
    %c1 = arith.constant 1 : index
    %c0_7 = arith.constant 0 : index
    %5 = vector.load %arg5[%c0_6, %c1, %c0_7] : memref<1x18x128xf32, #tpu.memory_space<vmem>>, vector<1x16x1xf32>
    tpu.vector_store %arg5[%c0_6, %c1, %c0_7], %4 {strides = array<i32>} : memref<1x18x128xf32, #tpu.memory_space<vmem>>, vector<1x16x1xf32>,
    %cst_8 = arith.constant 0.000000e+00 : f32
    %6 = vector.broadcast %cst_8 : f32 to vector<1x16x111xf32>
    %c0_9 = arith.constant 0 : index
    %c1_10 = arith.constant 1 : index
    %c17_11 = arith.constant 17 : index
    %7 = vector.load %arg5[%c0_9, %c1_10, %c17_11] : memref<1x18x128xf32, #tpu.memory_space<vmem>>, vector<1x16x111xf32>
    tpu.vector_store %arg5[%c0_9, %c1_10, %c17_11], %6 {strides = array<i32>} : memref<1x18x128xf32, #tpu.memory_space<vmem>>, vector<1x16x111xf32>,
    %c0_12 = arith.constant 0 : index
    %c0_13 = arith.constant 0 : index
    %c0_14 = arith.constant 0 : index
    %8 = vector.load %arg3[%c0_12, %c0_13, %c0_14] : memref<1x16x16xf32, #tpu.memory_space<vmem>>, vector<1x16x16xf32>
    %c0_15 = arith.constant 0 : index
    %c1_16 = arith.constant 1 : index
    %c1_17 = arith.constant 1 : index
    %9 = vector.load %arg5[%c0_15, %c1_16, %c1_17] : memref<1x18x128xf32, #tpu.memory_space<vmem>>, vector<1x16x16xf32>
    tpu.vector_store %arg5[%c0_15, %c1_16, %c1_17], %8 {strides = array<i32>} : memref<1x18x128xf32, #tpu.memory_space<vmem>>, vector<1x16x16xf32>,
    %c0_18 = arith.constant 0 : index
    %10 = memref.load %arg2[%c0_18] : memref<2xf32, #tpu.memory_space<smem>>
    %11 = vector.broadcast %10 : f32 to vector<1x16x128xf32>
    %c0_19 = arith.constant 0 : index
    %c0_20 = arith.constant 0 : index
    %c0_21 = arith.constant 0 : index
    %12 = vector.load %arg5[%c0_19, %c0_20, %c0_21] : memref<1x18x128xf32, #tpu.memory_space<vmem>>, vector<1x16x128xf32>
    %c0_22 = arith.constant 0 : index
    %13 = memref.load %arg1[%c0_22] : memref<18xf32, #tpu.memory_space<smem>>
    %14 = vector.broadcast %13 : f32 to vector<1x16x128xf32>
    %15 = arith.mulf %14, %12 : vector<1x16x128xf32>
    %16 = arith.addf %11, %15 : vector<1x16x128xf32>
    %c127_i32 = arith.constant 127 : i32
    %17 = tpu.dynamic_rotate %12 by %c127_i32 dim 2 : vector<1x16x128xf32>, i32 -> vector<1x16x128xf32>
    %c1_23 = arith.constant 1 : index
    %18 = memref.load %arg1[%c1_23] : memref<18xf32, #tpu.memory_space<smem>>
    %19 = vector.broadcast %18 : f32 to vector<1x16x128xf32>
    %20 = arith.mulf %19, %17 : vector<1x16x128xf32>
    %21 = arith.addf %16, %20 : vector<1x16x128xf32>
    %c126_i32 = arith.constant 126 : i32
    %22 = tpu.dynamic_rotate %12 by %c126_i32 dim 2 : vector<1x16x128xf32>, i32 -> vector<1x16x128xf32>
    %c2 = arith.constant 2 : index
    %23 = memref.load %arg1[%c2] : memref<18xf32, #tpu.memory_space<smem>>
    %24 = vector.broadcast %23 : f32 to vector<1x16x128xf32>
    %25 = arith.mulf %24, %22 : vector<1x16x128xf32>
    %26 = arith.addf %21, %25 : vector<1x16x128xf32>
    %c0_24 = arith.constant 0 : index
    %c1_25 = arith.constant 1 : index
    %c0_26 = arith.constant 0 : index
    %27 = vector.load %arg5[%c0_24, %c1_25, %c0_26] : memref<1x18x128xf32, #tpu.memory_space<vmem>>, vector<1x16x128xf32>
    %c3 = arith.constant 3 : index
    %28 = memref.load %arg1[%c3] : memref<18xf32, #tpu.memory_space<smem>>
    %29 = vector.broadcast %28 : f32 to vector<1x16x128xf32>
    %30 = arith.mulf %29, %27 : vector<1x16x128xf32>
    %31 = arith.addf %26, %30 : vector<1x16x128xf32>
    %c127_i32_27 = arith.constant 127 : i32
    %32 = tpu.dynamic_rotate %27 by %c127_i32_27 dim 2 : vector<1x16x128xf32>, i32 -> vector<1x16x128xf32>
    %c4 = arith.constant 4 : index
    %33 = memref.load %arg1[%c4] : memref<18xf32, #tpu.memory_space<smem>>
    %34 = vector.broadcast %33 : f32 to vector<1x16x128xf32>
    %35 = arith.mulf %34, %32 : vector<1x16x128xf32>
    %36 = arith.addf %31, %35 : vector<1x16x128xf32>
    %c126_i32_28 = arith.constant 126 : i32
    %37 = tpu.dynamic_rotate %27 by %c126_i32_28 dim 2 : vector<1x16x128xf32>, i32 -> vector<1x16x128xf32>
    %c5 = arith.constant 5 : index
    %38 = memref.load %arg1[%c5] : memref<18xf32, #tpu.memory_space<smem>>
    %39 = vector.broadcast %38 : f32 to vector<1x16x128xf32>
    %40 = arith.mulf %39, %37 : vector<1x16x128xf32>
    %41 = arith.addf %36, %40 : vector<1x16x128xf32>
    %c0_29 = arith.constant 0 : index
    %c2_30 = arith.constant 2 : index
    %c0_31 = arith.constant 0 : index
    %42 = vector.load %arg5[%c0_29, %c2_30, %c0_31] : memref<1x18x128xf32, #tpu.memory_space<vmem>>, vector<1x16x128xf32>
    %c6 = arith.constant 6 : index
    %43 = memref.load %arg1[%c6] : memref<18xf32, #tpu.memory_space<smem>>
    %44 = vector.broadcast %43 : f32 to vector<1x16x128xf32>
    %45 = arith.mulf %44, %42 : vector<1x16x128xf32>
    %46 = arith.addf %41, %45 : vector<1x16x128xf32>
    %c127_i32_32 = arith.constant 127 : i32
    %47 = tpu.dynamic_rotate %42 by %c127_i32_32 dim 2 : vector<1x16x128xf32>, i32 -> vector<1x16x128xf32>
    %c7 = arith.constant 7 : index
    %48 = memref.load %arg1[%c7] : memref<18xf32, #tpu.memory_space<smem>>
    %49 = vector.broadcast %48 : f32 to vector<1x16x128xf32>
    %50 = arith.mulf %49, %47 : vector<1x16x128xf32>
    %51 = arith.addf %46, %50 : vector<1x16x128xf32>
    %c126_i32_33 = arith.constant 126 : i32
    %52 = tpu.dynamic_rotate %42 by %c126_i32_33 dim 2 : vector<1x16x128xf32>, i32 -> vector<1x16x128xf32>
    %c8 = arith.constant 8 : index
    %53 = memref.load %arg1[%c8] : memref<18xf32, #tpu.memory_space<smem>>
    %54 = vector.broadcast %53 : f32 to vector<1x16x128xf32>
    %55 = arith.mulf %54, %52 : vector<1x16x128xf32>
    %56 = arith.addf %51, %55 : vector<1x16x128xf32>
    %57 = vector.extract_strided_slice %56 {offsets = [0, 0, 0], sizes = [1, 16, 16], strides = [1, 1, 1]} : vector<1x16x128xf32> to vector<1x16x16xf32>
    %c0_34 = arith.constant 0 : index
    %c0_35 = arith.constant 0 : index
    %c0_36 = arith.constant 0 : index
    %58 = vector.load %arg4[%c0_34, %c0_35, %c0_36] : memref<1x16x32xf32, #tpu.memory_space<vmem>>, vector<1x16x16xf32>
    tpu.vector_store %arg4[%c0_34, %c0_35, %c0_36], %57 {strides = array<i32>} : memref<1x16x32xf32, #tpu.memory_space<vmem>>, vector<1x16x16xf32>,
    %c1_37 = arith.constant 1 : index
    %59 = memref.load %arg2[%c1_37] : memref<2xf32, #tpu.memory_space<smem>>
    %60 = vector.broadcast %59 : f32 to vector<1x16x128xf32>
    %c0_38 = arith.constant 0 : index
    %c0_39 = arith.constant 0 : index
    %c0_40 = arith.constant 0 : index
    %61 = vector.load %arg5[%c0_38, %c0_39, %c0_40] : memref<1x18x128xf32, #tpu.memory_space<vmem>>, vector<1x16x128xf32>
    %c9 = arith.constant 9 : index
    %62 = memref.load %arg1[%c9] : memref<18xf32, #tpu.memory_space<smem>>
    %63 = vector.broadcast %62 : f32 to vector<1x16x128xf32>
    %64 = arith.mulf %63, %61 : vector<1x16x128xf32>
    %65 = arith.addf %60, %64 : vector<1x16x128xf32>
    %c127_i32_41 = arith.constant 127 : i32
    %66 = tpu.dynamic_rotate %61 by %c127_i32_41 dim 2 : vector<1x16x128xf32>, i32 -> vector<1x16x128xf32>
    %c10 = arith.constant 10 : index
    %67 = memref.load %arg1[%c10] : memref<18xf32, #tpu.memory_space<smem>>
    %68 = vector.broadcast %67 : f32 to vector<1x16x128xf32>
    %69 = arith.mulf %68, %66 : vector<1x16x128xf32>
    %70 = arith.addf %65, %69 : vector<1x16x128xf32>
    %c126_i32_42 = arith.constant 126 : i32
    %71 = tpu.dynamic_rotate %61 by %c126_i32_42 dim 2 : vector<1x16x128xf32>, i32 -> vector<1x16x128xf32>
    %c11 = arith.constant 11 : index
    %72 = memref.load %arg1[%c11] : memref<18xf32, #tpu.memory_space<smem>>
    %73 = vector.broadcast %72 : f32 to vector<1x16x128xf32>
    %74 = arith.mulf %73, %71 : vector<1x16x128xf32>
    %75 = arith.addf %70, %74 : vector<1x16x128xf32>
    %c0_43 = arith.constant 0 : index
    %c1_44 = arith.constant 1 : index
    %c0_45 = arith.constant 0 : index
    %76 = vector.load %arg5[%c0_43, %c1_44, %c0_45] : memref<1x18x128xf32, #tpu.memory_space<vmem>>, vector<1x16x128xf32>
    %c12 = arith.constant 12 : index
    %77 = memref.load %arg1[%c12] : memref<18xf32, #tpu.memory_space<smem>>
    %78 = vector.broadcast %77 : f32 to vector<1x16x128xf32>
    %79 = arith.mulf %78, %76 : vector<1x16x128xf32>
    %80 = arith.addf %75, %79 : vector<1x16x128xf32>
    %c127_i32_46 = arith.constant 127 : i32
    %81 = tpu.dynamic_rotate %76 by %c127_i32_46 dim 2 : vector<1x16x128xf32>, i32 -> vector<1x16x128xf32>
    %c13 = arith.constant 13 : index
    %82 = memref.load %arg1[%c13] : memref<18xf32, #tpu.memory_space<smem>>
    %83 = vector.broadcast %82 : f32 to vector<1x16x128xf32>
    %84 = arith.mulf %83, %81 : vector<1x16x128xf32>
    %85 = arith.addf %80, %84 : vector<1x16x128xf32>
    %c126_i32_47 = arith.constant 126 : i32
    %86 = tpu.dynamic_rotate %76 by %c126_i32_47 dim 2 : vector<1x16x128xf32>, i32 -> vector<1x16x128xf32>
    %c14 = arith.constant 14 : index
    %87 = memref.load %arg1[%c14] : memref<18xf32, #tpu.memory_space<smem>>
    %88 = vector.broadcast %87 : f32 to vector<1x16x128xf32>
    %89 = arith.mulf %88, %86 : vector<1x16x128xf32>
    %90 = arith.addf %85, %89 : vector<1x16x128xf32>
    %c0_48 = arith.constant 0 : index
    %c2_49 = arith.constant 2 : index
    %c0_50 = arith.constant 0 : index
    %91 = vector.load %arg5[%c0_48, %c2_49, %c0_50] : memref<1x18x128xf32, #tpu.memory_space<vmem>>, vector<1x16x128xf32>
    %c15 = arith.constant 15 : index
    %92 = memref.load %arg1[%c15] : memref<18xf32, #tpu.memory_space<smem>>
    %93 = vector.broadcast %92 : f32 to vector<1x16x128xf32>
    %94 = arith.mulf %93, %91 : vector<1x16x128xf32>
    %95 = arith.addf %90, %94 : vector<1x16x128xf32>
    %c127_i32_51 = arith.constant 127 : i32
    %96 = tpu.dynamic_rotate %91 by %c127_i32_51 dim 2 : vector<1x16x128xf32>, i32 -> vector<1x16x128xf32>
    %c16 = arith.constant 16 : index
    %97 = memref.load %arg1[%c16] : memref<18xf32, #tpu.memory_space<smem>>
    %98 = vector.broadcast %97 : f32 to vector<1x16x128xf32>
    %99 = arith.mulf %98, %96 : vector<1x16x128xf32>
    %100 = arith.addf %95, %99 : vector<1x16x128xf32>
    %c126_i32_52 = arith.constant 126 : i32
    %101 = tpu.dynamic_rotate %91 by %c126_i32_52 dim 2 : vector<1x16x128xf32>, i32 -> vector<1x16x128xf32>
    %c17_53 = arith.constant 17 : index
    %102 = memref.load %arg1[%c17_53] : memref<18xf32, #tpu.memory_space<smem>>
    %103 = vector.broadcast %102 : f32 to vector<1x16x128xf32>
    %104 = arith.mulf %103, %101 : vector<1x16x128xf32>
    %105 = arith.addf %100, %104 : vector<1x16x128xf32>
    %106 = vector.extract_strided_slice %105 {offsets = [0, 0, 0], sizes = [1, 16, 16], strides = [1, 1, 1]} : vector<1x16x128xf32> to vector<1x16x16xf32>
    %c0_54 = arith.constant 0 : index
    %c0_55 = arith.constant 0 : index
    %c16_56 = arith.constant 16 : index
    %107 = vector.load %arg4[%c0_54, %c0_55, %c16_56] : memref<1x16x32xf32, #tpu.memory_space<vmem>>, vector<1x16x16xf32>
    tpu.vector_store %arg4[%c0_54, %c0_55, %c16_56], %106 {strides = array<i32>} : memref<1x16x32xf32, #tpu.memory_space<vmem>>, vector<1x16x16xf32>,
    return
  }
  func.func @transform_0(%arg0: i32) -> i32 {
    %c0_i32 = arith.constant 0 : i32
    %c0_i32_0 = arith.constant 0 : i32
    return %c0_i32 : i32
  }
  func.func @transform_1(%arg0: i32) -> i32 {
    %c0_i32 = arith.constant 0 : i32
    %c0_i32_0 = arith.constant 0 : i32
    return %c0_i32 : i32
  }
  func.func @transform_2(%arg0: i32) -> (i32, i32, i32) {
    %c0_i32 = arith.constant 0 : i32
    %c0_i32_0 = arith.constant 0 : i32
    %c0_i32_1 = arith.constant 0 : i32
    return %arg0, %c0_i32, %c0_i32_0 : i32, i32, i32
  }
  func.func @transform_3(%arg0: i32) -> (i32, i32, i32) {
    %c0_i32 = arith.constant 0 : i32
    %c0_i32_0 = arith.constant 0 : i32
    %c0_i32_1 = arith.constant 0 : i32
    return %arg0, %c0_i32, %c0_i32_0 : i32, i32, i32
  }
}

</mosaic_0001>

<llo_original>
// kernel: tpu_custom_call.1
$region0: #{tpu_custom_call.1}
  #allocation0 [shape = 'u32[]', space=smem, size = 0x4, offset = 0x4, fixed_abs, tag = 'smem constant byte address 0x4 - core index']
  #allocation1 [shape = 'u32[72,128]{1,0:T(1,128)}', space=vmem, size = 0x9000, scoped, tag = 'internal scratch']
  #allocation2 [shape = 'f32[1,18,128]{2,1,0:T(8,128)}', space=vmem, size = 0x3000, scoped, tag = 'scratch operand']
  %s0 = inlined_call_operand.hbm [shape: f32[18], index: 0, kind: input, shape index: {}]
  %s1 = inlined_call_operand.hbm [shape: f32[2], index: 1, kind: input, shape index: {}]
  %s2 = inlined_call_operand.hbm [shape: f32[2,16,16], index: 2, kind: input, shape index: {}]
  %s3 = inlined_call_operand.hbm [shape: f32[2,16,32], index: 3, kind: output, shape index: {}]
  %s4 = sld [smem:[#allocation0]]
  $region57: #{tpu_custom_call.1} parent=0
    _
  %s6 = ssub.s32 1, %s4
  %s7 = scalar_select 0, %s6, %s4
  $region1: #{tpu_custom_call.1} parent=0
    #allocation3 [shape = 'u8[512]{0}', space=smem, size = 0x200, scoped, tag = 'input window, operand 0, single buffered']
    #allocation4 [shape = 's32[2]{0}', space=sflag, size = 0x8, scoped, tag = 'scoped memory for tpu_custom_call.1']
    #allocation5 [shape = 's32[2]{0}', space=sflag, size = 0x8, scoped, tag = 'scoped memory for tpu_custom_call.1']
    #allocation6 [shape = 's32[2]{0}', space=sflag, size = 0x8, scoped, tag = 'scoped memory for tpu_custom_call.1']
    #allocation7 [shape = 'u8[512]{0}', space=smem, size = 0x200, scoped, tag = 'input window, operand 1, single buffered']
    #allocation8 [shape = 's32[1]{0}', space=sflag, size = 0x4, scoped, tag = 'scoped memory for tpu_custom_call.1']
    #allocation9 [shape = 'u8[16384]{0}', space=vmem, size = 0x4000, scoped, tag = 'input window, operand 2']
    #allocation10 [shape = 'u8[16384]{0}', space=vmem, size = 0x4000, scoped, tag = 'output window, operand 0']
    %8 = vsyncpa [#allocation6], 0
    %9 = vsyncpa [#allocation8], 0
    %10 = vsyncpa [#allocation4], 0
    %s11 = scalar_lea.sflag [#allocation4], 1
    %12 = vsyncpa %s11, 0
    %13 = vsyncpa [#allocation5], 0
    %s14 = scalar_lea.sflag [#allocation5], 1
    %15 = vsyncpa %s14, 0
    loop: start=0, step=1, limit=4
    $region2: #{tpu_custom_call.1} parent=1 // loop_pre_header
      _
    $region3: #{tpu_custom_call.1} parent=1 // loop_header
      %s17 = sphi 0, %s21
      %p18 = scmp.ge.s32.totalorder %s17, 4
      %s25 = sphi 0, %s25
      %s27 = sphi 0, %s25
      %s28 = sphi 0, %s27
      %s42 = sphi 0, %s28
      %s46 = sphi 0, %s46
      %s48 = sphi 0, %s46
      %s49 = sphi 0, %s48
      %s63 = sphi 0, %s49
      %s69 = sphi 0, %s71
      %s72 = sphi 0, %s69
      %s73 = sphi 0, %s72
      %s89 = sphi 0, %s73
      %s95 = sphi 0, %s97
      %s98 = sphi 0, %s95
      %s99 = sphi 0, %s98
      %s115 = sphi 0, %s99
    $region4: #{tpu_custom_call.1} parent=1 // loop_header_branch
      %20 = sbr.rel (%p18) target = $region8
    $region5: #{tpu_custom_call.1} parent=1 // loop_body
      %s22 = ssub.s32 %s17, 1
      %s23 = ssub.s32 %s17, 2
      %s24 = sadd.s32 %s17, 1
      %s26 = sadd.s32 %s25, 1
      %p29 = scmp.eq.s32.totalorder %s17, 1
      %p30 = scmp.ne.s32.totalorder %s25, %s27
      %p31 = scmp.eq.s32.totalorder %s17, 0
      %p32 = por %p30, %p31
      %p33 = scmp.ne.s32.totalorder %s25, %s27
      %p34 = scmp.eq.s32.totalorder %s22, 1
      %p35 = por %p33, %p34
      %p36 = scmp.ne.s32.totalorder %s27, %s28
      %p37 = scmp.eq.s32.totalorder %s22, 0
      %p38 = por %p36, %p37
      %p39 = scmp.ne.s32.totalorder %s27, %s28
      %p40 = scmp.eq.s32.totalorder %s23, 1
      %p41 = por %p39, %p40
      %p43 = scmp.ne.s32.totalorder %s28, %s42
      %p44 = scmp.eq.s32.totalorder %s23, 0
      %p45 = por %p43, %p44
      %s47 = sadd.s32 %s46, 1
      %p50 = scmp.eq.s32.totalorder %s17, 1
      %p51 = scmp.ne.s32.totalorder %s46, %s48
      %p52 = scmp.eq.s32.totalorder %s17, 0
      %p53 = por %p51, %p52
      %p54 = scmp.ne.s32.totalorder %s46, %s48
      %p55 = scmp.eq.s32.totalorder %s22, 1
      %p56 = por %p54, %p55
      %p57 = scmp.ne.s32.totalorder %s48, %s49
      %p58 = scmp.eq.s32.totalorder %s22, 0
      %p59 = por %p57, %p58
      %p60 = scmp.ne.s32.totalorder %s48, %s49
      %p61 = scmp.eq.s32.totalorder %s23, 1
      %p62 = por %p60, %p61
      %p64 = scmp.ne.s32.totalorder %s49, %s63
      %p65 = scmp.eq.s32.totalorder %s23, 0
      %p66 = por %p64, %p65
      %s67 = ssub.s32 %s17, %s24
      %p68 = scmp.eq.s32.totalorder %s67, 0
      %s70 = sadd.s32 %s69, 1
      %s71 = scalar_select %p68, %s69, %s70
      %p74 = pneg %p68
      %p75 = scmp.eq.s32.totalorder %s17, 1
      %p76 = por %p74, %p75
      %p77 = scmp.ne.s32.totalorder %s69, %s72
      %p78 = scmp.eq.s32.totalorder %s17, 0
      %p79 = por %p77, %p78
      %p80 = scmp.ne.s32.totalorder %s69, %s72
      %p81 = scmp.eq.s32.totalorder %s22, 1
      %p82 = por %p80, %p81
      %p83 = scmp.ne.s32.totalorder %s72, %s73
      %p84 = scmp.eq.s32.totalorder %s22, 0
      %p85 = por %p83, %p84
      %p86 = scmp.ne.s32.totalorder %s72, %s73
      %p87 = scmp.eq.s32.totalorder %s23, 1
      %p88 = por %p86, %p87
      %p90 = scmp.ne.s32.totalorder %s73, %s89
      %p91 = scmp.eq.s32.totalorder %s23, 0
      %p92 = por %p90, %p91
      %s93 = ssub.s32 %s17, %s24
      %p94 = scmp.eq.s32.totalorder %s93, 0
      %s96 = sadd.s32 %s95, 1
      %s97 = scalar_select %p94, %s95, %s96
      %p100 = pneg %p94
      %p101 = scmp.eq.s32.totalorder %s17, 1
      %p102 = por %p100, %p101
      %p103 = scmp.ne.s32.totalorder %s95, %s98
      %p104 = scmp.eq.s32.totalorder %s17, 0
      %p105 = por %p103, %p104
      %p106 = scmp.ne.s32.totalorder %s95, %s98
      %p107 = scmp.eq.s32.totalorder %s22, 1
      %p108 = por %p106, %p107
      %p109 = scmp.ne.s32.totalorder %s98, %s99
      %p110 = scmp.eq.s32.totalorder %s22, 0
      %p111 = por %p109, %p110
      %p112 = scmp.ne.s32.totalorder %s98, %s99
      %p113 = scmp.eq.s32.totalorder %s23, 1
      %p114 = por %p112, %p113
      %p116 = scmp.ne.s32.totalorder %s99, %s115
      %p117 = scmp.eq.s32.totalorder %s23, 0
      %p118 = por %p116, %p117
      %p119 = scmp.le.s32.totalorder 1, %s17
      %p120 = scmp.lt.s32.totalorder %s17, 3
      %p121 = pnand %p119, %p120
      %p122 = pneg %p121
      // Predicated region
      $region9: #{tpu_custom_call.1} parent=5 // pred_check
        _
      $region10: #{tpu_custom_call.1} parent=5 // pred_check_branch
        %124 = sbr.rel (%p121) target = $region12
      $region11: #{tpu_custom_call.1} parent=5 // pred_region
        %s125 = ssub.s32 %s17, 1
        // Predicated region
        $region13: #{tpu_custom_call.1} parent=11 // pred_check
          %p126 = pneg %p38
        $region14: #{tpu_custom_call.1} parent=11 // pred_check_branch
          %128 = sbr.rel (%p126) target = $region16
        $region15: #{tpu_custom_call.1} parent=11 // pred_region
          %130 = vsyncadd [#allocation6], 0
          %s132 = sshll.u32 %s0, 4
          %s133 = int_to_ptr.hbm [resolvable:$true] %s132
          %135 = dma.hbm_to_smem %s133, 16, [#allocation3], [#allocation6]
        $region16: #{tpu_custom_call.1} parent=11 // pred_fallthru
          _
        // Predicated region
        $region17: #{tpu_custom_call.1} parent=11 // pred_check
          %p136 = pneg %p59
        $region18: #{tpu_custom_call.1} parent=11 // pred_check_branch
          %138 = sbr.rel (%p136) target = $region20
        $region19: #{tpu_custom_call.1} parent=11 // pred_region
          %140 = vsyncadd [#allocation8], 0
          %s142 = sshll.u32 %s1, 4
          %s143 = int_to_ptr.hbm [resolvable:$true] %s142
          %145 = dma.hbm_to_smem %s143, 16, [#allocation7], [#allocation8]
        $region20: #{tpu_custom_call.1} parent=11 // pred_fallthru
          _
      $region12: #{tpu_custom_call.1} parent=5 // pred_fallthru
        _
      %p146 = scmp.lt.s32.totalorder %s17, 2
      // Predicated region
      $region21: #{tpu_custom_call.1} parent=5 // pred_check
        %p147 = pneg %p146
      $region22: #{tpu_custom_call.1} parent=5 // pred_check_branch
        %149 = sbr.rel (%p147) target = $region24
      $region23: #{tpu_custom_call.1} parent=5 // pred_region
        // Predicated region
        $region25: #{tpu_custom_call.1} parent=23 // pred_check
          %p150 = pneg %p79
        $region26: #{tpu_custom_call.1} parent=23 // pred_check_branch
          %152 = sbr.rel (%p150) target = $region28
        $region27: #{tpu_custom_call.1} parent=23 // pred_region
          %s153 = sand.u32 %s69, 1
          %s154 = scalar_lea.sflag [#allocation4], %s153
          %s155 = sand.u32 %s69, 1
          %s156 = smul.addr %s155, 16
          %s157 = scalar_lea.vmem [#allocation9], %s156
          %159 = vsyncadd %s154, 0
          %s160 = smul.addr %s17, 2
          %s161 = smul.addr %s160, 8
          %s162 = scalar_lea.hbm %s2, %s161
          %s163 = sshll.u32 %s162, 4
          %s164 = int_to_ptr.hbm [resolvable:$true] %s163
          %s165 = sshll.u32 %s157, 4
          %s166 = int_to_ptr.vmem [resolvable:$true] %s165
          %171 = dma.hbm_to_vmem [thread:$0]  %s164, 256, %s166, %s154, 128, 128, 8
        $region28: #{tpu_custom_call.1} parent=23 // pred_fallthru
          _
      $region24: #{tpu_custom_call.1} parent=5 // pred_fallthru
        _
      %p172 = scmp.le.s32.totalorder 1, %s17
      %p173 = scmp.lt.s32.totalorder %s17, 3
      %p174 = pnand %p172, %p173
      %p175 = pneg %p174
      // Predicated region
      $region29: #{tpu_custom_call.1} parent=5 // pred_check
        _
      $region30: #{tpu_custom_call.1} parent=5 // pred_check_branch
        %177 = sbr.rel (%p174) target = $region32
      $region31: #{tpu_custom_call.1} parent=5 // pred_region
        %s178 = ssub.s32 %s17, 1
        // Predicated region
        $region33: #{tpu_custom_call.1} parent=31 // pred_check
          %p179 = pneg %p38
        $region34: #{tpu_custom_call.1} parent=31 // pred_check_branch
          %181 = sbr.rel (%p179) target = $region36
        $region35: #{tpu_custom_call.1} parent=31 // pred_region
          %183 = dma.done [#allocation6], 16
        $region36: #{tpu_custom_call.1} parent=31 // pred_fallthru
          _
        // Predicated region
        $region37: #{tpu_custom_call.1} parent=31 // pred_check
          %p184 = pneg %p59
        $region38: #{tpu_custom_call.1} parent=31 // pred_check_branch
          %186 = sbr.rel (%p184) target = $region40
        $region39: #{tpu_custom_call.1} parent=31 // pred_region
          %188 = dma.done [#allocation8], 16
        $region40: #{tpu_custom_call.1} parent=31 // pred_fallthru
          _
        %s189 = sand.u32 %s72, 1
        %s190 = scalar_lea.sflag [#allocation4], %s189
        %s191 = sand.u32 %s72, 1
        %s192 = smul.addr %s191, 16
        %s193 = scalar_lea.vmem [#allocation9], %s192
        // Predicated region
        $region41: #{tpu_custom_call.1} parent=31 // pred_check
          %p194 = pneg %p85
        $region42: #{tpu_custom_call.1} parent=31 // pred_check_branch
          %196 = sbr.rel (%p194) target = $region44
        $region43: #{tpu_custom_call.1} parent=31 // pred_region
          %198 = dma.done %s190, 256
        $region44: #{tpu_custom_call.1} parent=31 // pred_fallthru
          _
        %199 = sfence
        %p200 = pneg %p38
        %p201 = pneg %p35
        %p202 = pneg %p59
        %p203 = pneg %p56
        %s204 = sand.u32 %s72, 1
        %s205 = scalar_lea.sflag [#allocation4], %s204
        %s206 = sand.u32 %s72, 1
        %s207 = smul.addr %s206, 16
        %s208 = scalar_lea.vmem [#allocation9], %s207
        %p209 = pneg %p85
        %p210 = pneg %p82
        %p211 = pneg %p111
        %p212 = pneg %p108
        %s213 = sand.u32 %s98, 1
        %s214 = scalar_lea.sflag [#allocation5], %s213
        %s215 = sand.u32 %s98, 1
        %s216 = smul.addr %s215, 16
        %s217 = scalar_lea.vmem [#allocation10], %s216
        %218 = vst [vmem:[#allocation2] sm:$0x1] 0.0
        %219 = vst [vmem:[#allocation2 + $0x11] sm:$0x1] 0.0
        %vm220 = vcmask 7168
        %221 = vst.msk [vmem:[#allocation2 + $0x1] sm:$0xff] %vm220, 0.0
        %222 = vst.msk [vmem:[#allocation2 + $0x9] sm:$0xff] %vm220, 0.0
        %vm223 = vcmask 1047688
        %224 = vst.msk [vmem:[#allocation2 + $0x1] sm:$0xff] %vm223, 0.0
        %225 = vst.msk [vmem:[#allocation2 + $0x9] sm:$0xff] %vm223, 0.0
        %v226 = vld [vmem:[%s193] sm:$0xff]
        %v227 = vld [vmem:[%s193 + $0x8] sm:$0xff]
        %230 = vrot.lane.b32.xlu0 %v226, 1
        %v231 = vpop.permute.xlu0 %230
        %232 = vrot.lane.b32.xlu0 %v227, 1
        %v233 = vpop.permute.xlu0 %232
        %vm236 = vcmask 138248
        %237 = vst.msk [vmem:[#allocation2 + $0x1] sm:$0xff] %vm236, %v231
        %238 = vst.msk [vmem:[#allocation2 + $0x9] sm:$0xff] %vm236, %v233
        %s239 = sld [smem:[#allocation7]]
        %v240 = vstv %s239
        %v241 = vld [vmem:[#allocation2] sm:$0xff]
        %v242 = vld [vmem:[#allocation2 + $0x8] sm:$0xff]
        %s243 = sld [smem:[#allocation3]]
        %v244 = vstv %s243
        %v245 = vmul.f32 %v244, %v241
        %v246 = vmul.f32 %v244, %v242
        %v247 = vadd.f32 %v240, %v245
        %v248 = vadd.f32 %v240, %v246
        %249 = vrot.lane.b32.xlu0 %v241, 127
        %v250 = vpop.permute.xlu0 %249
        %251 = vrot.lane.b32.xlu0 %v242, 127
        %v252 = vpop.permute.xlu0 %251
        %s253 = sld [smem:[#allocation3 + $0x1]]
        %v254 = vstv %s253
        %v255 = vmul.f32 %v254, %v250
        %v256 = vmul.f32 %v254, %v252
        %v257 = vadd.f32 %v247, %v255
        %v258 = vadd.f32 %v248, %v256
        %259 = vrot.lane.b32.xlu0 %v241, 126
        %v260 = vpop.permute.xlu0 %259
        %261 = vrot.lane.b32.xlu0 %v242, 126
        %v262 = vpop.permute.xlu0 %261
        %s263 = sld [smem:[#allocation3 + $0x2]]
        %v264 = vstv %s263
        %v265 = vmul.f32 %v264, %v260
        %v266 = vmul.f32 %v264, %v262
        %v267 = vadd.f32 %v257, %v265
        %v268 = vadd.f32 %v258, %v266
        %v269 = vld [vmem:[#allocation2 + $0x1] sm:$0xff]
        %v270 = vld [vmem:[#allocation2 + $0x9] sm:$0xff]
        %s271 = sld [smem:[#allocation3 + $0x3]]
        %v272 = vstv %s271
        %v273 = vmul.f32 %v272, %v269
        %v274 = vmul.f32 %v272, %v270
        %v275 = vadd.f32 %v267, %v273
        %v276 = vadd.f32 %v268, %v274
        %277 = vrot.lane.b32.xlu0 %v269, 127
        %v278 = vpop.permute.xlu0 %277
        %279 = vrot.lane.b32.xlu0 %v270, 127
        %v280 = vpop.permute.xlu0 %279
        %s281 = sld [smem:[#allocation3 + $0x4]]
        %v282 = vstv %s281
        %v283 = vmul.f32 %v282, %v278
        %v284 = vmul.f32 %v282, %v280
        %v285 = vadd.f32 %v275, %v283
        %v286 = vadd.f32 %v276, %v284
        %287 = vrot.lane.b32.xlu0 %v269, 126
        %v288 = vpop.permute.xlu0 %287
        %289 = vrot.lane.b32.xlu0 %v270, 126
        %v290 = vpop.permute.xlu0 %289
        %s291 = sld [smem:[#allocation3 + $0x5]]
        %v292 = vstv %s291
        %v293 = vmul.f32 %v292, %v288
        %v294 = vmul.f32 %v292, %v290
        %v295 = vadd.f32 %v285, %v293
        %v296 = vadd.f32 %v286, %v294
        %v297 = vld [vmem:[#allocation2 + $0x2] sm:$0xff]
        %v298 = vld [vmem:[#allocation2 + $0xa] sm:$0xff]
        %s299 = sld [smem:[#allocation3 + $0x6]]
        %v300 = vstv %s299
        %v301 = vmul.f32 %v300, %v297
        %v302 = vmul.f32 %v300, %v298
        %v303 = vadd.f32 %v295, %v301
        %v304 = vadd.f32 %v296, %v302
        %305 = vrot.lane.b32.xlu0 %v297, 127
        %v306 = vpop.permute.xlu0 %305
        %307 = vrot.lane.b32.xlu0 %v298, 127
        %v308 = vpop.permute.xlu0 %307
        %s309 = sld [smem:[#allocation3 + $0x7]]
        %v310 = vstv %s309
        %v311 = vmul.f32 %v310, %v306
        %v312 = vmul.f32 %v310, %v308
        %v313 = vadd.f32 %v303, %v311
        %v314 = vadd.f32 %v304, %v312
        %315 = vrot.lane.b32.xlu0 %v297, 126
        %v316 = vpop.permute.xlu0 %315
        %317 = vrot.lane.b32.xlu0 %v298, 126
        %v318 = vpop.permute.xlu0 %317
        %s319 = sld [smem:[#allocation3 + $0x8]]
        %v320 = vstv %s319
        %v321 = vmul.f32 %v320, %v316
        %v322 = vmul.f32 %v320, %v318
        %v323 = vadd.f32 %v313, %v321
        %v324 = vadd.f32 %v314, %v322
        %vm325 = vcmask 130048
        %326 = vst.msk [vmem:[%s217] sm:$0xff] %vm325, %v323
        %327 = vst.msk [vmem:[%s217 + $0x8] sm:$0xff] %vm325, %v324
        %s328 = sld [smem:[#allocation7 + $0x1]]
        %v329 = vstv %s328
        %v330 = vld [vmem:[#allocation2] sm:$0xff]
        %v331 = vld [vmem:[#allocation2 + $0x8] sm:$0xff]
        %s332 = sld [smem:[#allocation3 + $0x9]]
        %v333 = vstv %s332
        %v334 = vmul.f32 %v333, %v330
        %v335 = vmul.f32 %v333, %v331
        %v336 = vadd.f32 %v329, %v334
        %v337 = vadd.f32 %v329, %v335
        %338 = vrot.lane.b32.xlu0 %v330, 127
        %v339 = vpop.permute.xlu0 %338
        %340 = vrot.lane.b32.xlu0 %v331, 127
        %v341 = vpop.permute.xlu0 %340
        %s342 = sld [smem:[#allocation3 + $0xa]]
        %v343 = vstv %s342
        %v344 = vmul.f32 %v343, %v339
        %v345 = vmul.f32 %v343, %v341
        %v346 = vadd.f32 %v336, %v344
        %v347 = vadd.f32 %v337, %v345
        %348 = vrot.lane.b32.xlu0 %v330, 126
        %v349 = vpop.permute.xlu0 %348
        %350 = vrot.lane.b32.xlu0 %v331, 126
        %v351 = vpop.permute.xlu0 %350
        %s352 = sld [smem:[#allocation3 + $0xb]]
        %v353 = vstv %s352
        %v354 = vmul.f32 %v353, %v349
        %v355 = vmul.f32 %v353, %v351
        %v356 = vadd.f32 %v346, %v354
        %v357 = vadd.f32 %v347, %v355
        %v358 = vld [vmem:[#allocation2 + $0x1] sm:$0xff]
        %v359 = vld [vmem:[#allocation2 + $0x9] sm:$0xff]
        %s360 = sld [smem:[#allocation3 + $0xc]]
        %v361 = vstv %s360
        %v362 = vmul.f32 %v361, %v358
        %v363 = vmul.f32 %v361, %v359
        %v364 = vadd.f32 %v356, %v362
        %v365 = vadd.f32 %v357, %v363
        %366 = vrot.lane.b32.xlu0 %v358, 127
        %v367 = vpop.permute.xlu0 %366
        %368 = vrot.lane.b32.xlu0 %v359, 127
        %v369 = vpop.permute.xlu0 %368
        %s370 = sld [smem:[#allocation3 + $0xd]]
        %v371 = vstv %s370
        %v372 = vmul.f32 %v371, %v367
        %v373 = vmul.f32 %v371, %v369
        %v374 = vadd.f32 %v364, %v372
        %v375 = vadd.f32 %v365, %v373
        %376 = vrot.lane.b32.xlu0 %v358, 126
        %v377 = vpop.permute.xlu0 %376
        %378 = vrot.lane.b32.xlu0 %v359, 126
        %v379 = vpop.permute.xlu0 %378
        %s380 = sld [smem:[#allocation3 + $0xe]]
        %v381 = vstv %s380
        %v382 = vmul.f32 %v381, %v377
        %v383 = vmul.f32 %v381, %v379
        %v384 = vadd.f32 %v374, %v382
        %v385 = vadd.f32 %v375, %v383
        %v386 = vld [vmem:[#allocation2 + $0x2] sm:$0xff]
        %v387 = vld [vmem:[#allocation2 + $0xa] sm:$0xff]
        %s388 = sld [smem:[#allocation3 + $0xf]]
        %v389 = vstv %s388
        %v390 = vmul.f32 %v389, %v386
        %v391 = vmul.f32 %v389, %v387
        %v392 = vadd.f32 %v384, %v390
        %v393 = vadd.f32 %v385, %v391
        %394 = vrot.lane.b32.xlu0 %v386, 127
        %v395 = vpop.permute.xlu0 %394
        %396 = vrot.lane.b32.xlu0 %v387, 127
        %v397 = vpop.permute.xlu0 %396
        %s398 = sld [smem:[#allocation3 + $0x10]]
        %v399 = vstv %s398
        %v400 = vmul.f32 %v399, %v395
        %v401 = vmul.f32 %v399, %v397
        %v402 = vadd.f32 %v392, %v400
        %v403 = vadd.f32 %v393, %v401
        %404 = vrot.lane.b32.xlu0 %v386, 126
        %v405 = vpop.permute.xlu0 %404
        %406 = vrot.lane.b32.xlu0 %v387, 126
        %v407 = vpop.permute.xlu0 %406
        %s408 = sld [smem:[#allocation3 + $0x11]]
        %v409 = vstv %s408
        %v410 = vmul.f32 %v409, %v405
        %v411 = vmul.f32 %v409, %v407
        %v412 = vadd.f32 %v402, %v410
        %v413 = vadd.f32 %v403, %v411
        %416 = vrot.lane.b32.xlu0 %v412, 16
        %v417 = vpop.permute.xlu0 %416
        %418 = vrot.lane.b32.xlu0 %v413, 16
        %v419 = vpop.permute.xlu0 %418
        %vm422 = vcmask 261248
        %423 = vst.msk [vmem:[%s217] sm:$0xff] %vm422, %v417
        %424 = vst.msk [vmem:[%s217 + $0x8] sm:$0xff] %vm422, %v419
        %s425 = sand.u32 %s98, 1
        %s426 = scalar_lea.sflag [#allocation5], %s425
        %s427 = sand.u32 %s98, 1
        %s428 = smul.addr %s427, 16
        %s429 = scalar_lea.vmem [#allocation10], %s428
        // Predicated region
        $region45: #{tpu_custom_call.1} parent=31 // pred_check
          %p430 = pneg %p108
        $region46: #{tpu_custom_call.1} parent=31 // pred_check_branch
          %432 = sbr.rel (%p430) target = $region48
        $region47: #{tpu_custom_call.1} parent=31 // pred_region
          %434 = vsyncadd %s426, 0
          %s435 = smul.addr %s22, 2
          %s436 = smul.addr %s435, 8
          %s437 = scalar_lea.hbm %s3, %s436
          %s438 = sshll.u32 %s429, 4
          %s439 = int_to_ptr.vmem [resolvable:$true] %s438
          %s440 = sshll.u32 %s437, 4
          %s441 = int_to_ptr.hbm [resolvable:$true] %s440
          %446 = dma.vmem_to_hbm [thread:$0]  %s439, 256, %s441, %s426, 128, 128, 8
        $region48: #{tpu_custom_call.1} parent=31 // pred_fallthru
          _
      $region32: #{tpu_custom_call.1} parent=5 // pred_fallthru
        _
      %p447 = scmp.le.s32.totalorder 2, %s17
      // Predicated region
      $region49: #{tpu_custom_call.1} parent=5 // pred_check
        %p448 = pneg %p447
      $region50: #{tpu_custom_call.1} parent=5 // pred_check_branch
        %450 = sbr.rel (%p448) target = $region52
      $region51: #{tpu_custom_call.1} parent=5 // pred_region
        %s451 = ssub.s32 %s17, 2
        // Predicated region
        $region53: #{tpu_custom_call.1} parent=51 // pred_check
          %p452 = pneg %p114
        $region54: #{tpu_custom_call.1} parent=51 // pred_check_branch
          %454 = sbr.rel (%p452) target = $region56
        $region55: #{tpu_custom_call.1} parent=51 // pred_region
          %s455 = sand.u32 %s99, 1
          %s456 = scalar_lea.sflag [#allocation5], %s455
          %s457 = sand.u32 %s99, 1
          %s458 = smul.addr %s457, 16
          %s459 = scalar_lea.vmem [#allocation10], %s458
          %461 = dma.done %s456, 256
        $region56: #{tpu_custom_call.1} parent=51 // pred_fallthru
          _
      $region52: #{tpu_custom_call.1} parent=5 // pred_fallthru
        _
    $region6: #{tpu_custom_call.1} parent=1 // loop_footer
      %s21 = sadd.s32 1, %s17
    $region7: #{tpu_custom_call.1} parent=1 // loop_footer_branch
      %16 = sbr.rel target = $region3
    $region8: #{tpu_custom_call.1} parent=1 // loop_exit
      _
    %462 = vsyncpa [#allocation4], 1
    %s463 = scalar_lea.sflag [#allocation4], 1
    %464 = vsyncpa %s463, 1
    %465 = vsyncpa [#allocation5], 1
    %s466 = scalar_lea.sflag [#allocation5], 1
    %467 = vsyncpa %s466, 1
    %468 = vsyncpa [#allocation6], 1
    %s469 = scalar_lea.sflag [#allocation6], 1
    %470 = vsyncpa %s469, 1
    %471 = vsyncpa [#allocation8], 1

</llo_original>
